<compile_context>
chip_gen: v7x
topology: tpu7x:2x2x1
jax: 0.10.0
libtpu: 0.0.40
codegen_flags: <defaults>
</compile_context>

<pallas_src>
import jax
import jax.numpy as jnp
from jax import lax
from jax.experimental import pallas as pl
from jax.experimental.pallas import tpu as pltpu

SMALL_PROB = 1e-6
NUM_CODONS = 64  # 4 ** 3
LANES = 2 * NUM_CODONS  # two codon sites packed per 128-lane row


def _hit_class_kernel(parent_ref, probs_ref, table_ref, halfmask_ref, out_ref):
    """One tile of rows; each row packs TWO codon sites (64 lanes each).

    parent_ref  : (R, 2)    i32  flat parent codon index for the two sites of a row
    probs_ref   : (R, 128)  f32  uncorrected codon probs (child codon on lanes)
    table_ref   : (128,128) f32  block-diag [[corr[hamming], 0], [0, corr[hamming]]]
    halfmask_ref: (128,128) f32  block-diag [[ones, 0], [0, ones]] (per-site sum mask)
    out_ref     : (R, 128)  f32  corrected / renormalized / clamped codon probs
    """
    R = probs_ref.shape[0]
    lane = lax.broadcasted_iota(jnp.int32, (R, LANES), 1)

    p0 = parent_ref[:, 0:1]  # parent of even site -> lanes [0, 64)
    p1 = parent_ref[:, 1:2]  # parent of odd site  -> lanes [64, 128)
    is_parent = (lane == p0) | (lane == p1 + NUM_CODONS)        # (R, 128) bool
    onehot = is_parent.astype(jnp.float32)

    # Hit-class correction factor: one-hot(parent) x 128x128 table on the MXU.
    factor = jnp.dot(onehot, table_ref[...], preferred_element_type=jnp.float32)

    corrected = probs_ref[...] * factor                          # apply_multihit_correction
    clamped = jnp.minimum(corrected, 1.0 - SMALL_PROB)           # clamp_probability_above_only

    # set_parent_codon_prob: parent codon gets 1 - sum(other 63 codons of its site).
    non_parent = jnp.where(is_parent, 0.0, clamped)
    others_sum = jnp.dot(non_parent, halfmask_ref[...],
                         preferred_element_type=jnp.float32)     # per-site sum, bcast on lanes
    result = jnp.where(is_parent, 1.0 - others_sum, clamped)

    out_ref[...] = jnp.clip(result, SMALL_PROB, 1.0 - SMALL_PROB)  # clamp_probability


def hit_class_forward(parent_codon_idxs, uncorrected_codon_probs, values, *,
                      max_tile_rows=2048):
    """HitClassModel.forward.

    parent_codon_idxs      : (N, 3) int, bases in 0..3
    uncorrected_codon_probs: (N, 4, 4, 4) float
    values                 : (3,) float  (log correction factors for hit classes 1,2,3)
    returns                : (N, 4, 4, 4) float32
    """
    N = parent_codon_idxs.shape[0]

    # --- layout plumbing (free views; pad a single site only when N is odd) ---
    probs_flat = uncorrected_codon_probs.reshape(N, NUM_CODONS).astype(jnp.float32)
    pidx = parent_codon_idxs.astype(jnp.int32)
    parent_flat = pidx[:, 0] * 16 + pidx[:, 1] * 4 + pidx[:, 2]          # (N,)

    n_pad = N + (N & 1)
    if n_pad != N:
        probs_flat = jnp.pad(probs_flat, ((0, 1), (0, 0)))
        parent_flat = jnp.pad(parent_flat, ((0, 1),))
    rows = n_pad // 2
    probs2 = probs_flat.reshape(rows, LANES)     # (N/2, 128) — same memory, lane-dense
    parent2 = parent_flat.reshape(rows, 2)       # (N/2, 2)

    # --- constant 128x128 tables (hit-class factors + per-site ones mask) ---
    corr = jnp.exp(jnp.concatenate([jnp.zeros((1,), jnp.float32),
                                    values.astype(jnp.float32).reshape(3)]))
    child = jnp.arange(NUM_CODONS)
    bases = jnp.stack([child // 16, (child // 4) % 4, child % 4], axis=-1)   # (64, 3)
    ham = (bases[:, None, :] != bases[None, :, :]).sum(-1)                    # (64, 64)
    tab64 = corr[ham]                                                         # (64, 64)
    z64 = jnp.zeros((NUM_CODONS, NUM_CODONS), jnp.float32)
    o64 = jnp.ones((NUM_CODONS, NUM_CODONS), jnp.float32)
    table128 = jnp.concatenate(
        [jnp.concatenate([tab64, z64], axis=1),
         jnp.concatenate([z64, tab64], axis=1)], axis=0)                      # (128, 128)
    halfmask = jnp.concatenate(
        [jnp.concatenate([o64, z64], axis=1),
         jnp.concatenate([z64, o64], axis=1)], axis=0)                        # (128, 128)

    # --- tiling: large row tiles, but keep >= 2 grid steps (v7x dual TensorCore) ---
    def _round_up(x, m):
        return ((x + m - 1) // m) * m

    tile = min(max_tile_rows, max(8, _round_up(pl.cdiv(rows, 2), 8)))
    if tile >= rows:
        tile = rows          # tiny input: single full block
    grid = pl.cdiv(rows, tile)   # ragged edge block clipped by Pallas, no pad copy

    out2 = pl.pallas_call(
        _hit_class_kernel,
        out_shape=jax.ShapeDtypeStruct((rows, LANES), jnp.float32),
        grid=(grid,),
        in_specs=[
            pl.BlockSpec((tile, 2), lambda i: (i, 0)),         # flat parent indices
            pl.BlockSpec((tile, LANES), lambda i: (i, 0)),     # codon probs, 2 sites/row
            pl.BlockSpec((LANES, LANES), lambda i: (0, 0)),    # correction table (VMEM-resident)
            pl.BlockSpec((LANES, LANES), lambda i: (0, 0)),    # per-site sum mask (VMEM-resident)
        ],
        out_specs=pl.BlockSpec((tile, LANES), lambda i: (i, 0)),
        compiler_params=pltpu.CompilerParams(
            dimension_semantics=("parallel",)),
    )(parent2, probs2, table128, halfmask)

    out_flat = out2.reshape(n_pad, NUM_CODONS)
    if n_pad != N:
        out_flat = out_flat[:N]
    return out_flat.reshape(N, 4, 4, 4)


def _reference_forward(parent_codon_idxs, uncorrected_codon_probs, values):
    """Pure-JAX replica of the PyTorch forward, for verification."""
    N = parent_codon_idxs.shape[0]
    child = jnp.arange(NUM_CODONS)
    child_bases = jnp.stack([child // 16, (child // 4) % 4, child % 4], axis=-1)
    hc = (parent_codon_idxs[:, None, :] != child_bases[None, :, :]).sum(-1)     # (N, 64)
    corr = jnp.exp(jnp.concatenate([jnp.zeros((1,), jnp.float32),
                                    values.astype(jnp.float32)]))
    corrected = uncorrected_codon_probs.reshape(N, NUM_CODONS) * corr[hc]
    clamped = jnp.minimum(corrected, 1.0 - SMALL_PROB)
    parent_flat = (parent_codon_idxs[:, 0] * 16 + parent_codon_idxs[:, 1] * 4
                   + parent_codon_idxs[:, 2])
    parent_mask = jax.nn.one_hot(parent_flat, NUM_CODONS, dtype=jnp.bool_)
    others_sum = jnp.where(parent_mask, 0.0, clamped).sum(-1)
    result = jnp.where(parent_mask, (1.0 - others_sum)[:, None], clamped)
    result = jnp.clip(result, SMALL_PROB, 1.0 - SMALL_PROB)
    return result.reshape(N, 4, 4, 4)


def _make_inputs(key, n):
    k_idx, k_probs, k_vals = jax.random.split(key, 3)
    parent_codon_idxs = jax.random.randint(k_idx, (n, 3), 0, 4, jnp.int32)
    logits = jax.random.normal(k_probs, (n, NUM_CODONS), jnp.float32)
    probs = jax.nn.softmax(logits, axis=-1).reshape(n, 4, 4, 4)
    values = 0.3 * jax.random.normal(k_vals, (3,), jnp.float32)
    return parent_codon_idxs, probs, values


if __name__ == "__main__":
    key = jax.random.PRNGKey(0)

    # Small even-N case (single block).
    pci, probs, vals = _make_inputs(key, 6)
    out = jax.block_until_ready(hit_class_forward(pci, probs, vals))
    ref = _reference_forward(pci, probs, vals)
    assert out.shape == (6, 4, 4, 4)
    assert bool(jnp.all(jnp.isfinite(out)))
    assert jnp.allclose(out, ref, atol=1e-5, rtol=1e-5)

    # Small odd-N case exercising the one-row pack pad, >1 grid step and ragged edge.
    pci2, probs2, vals2 = _make_inputs(jax.random.PRNGKey(1), 37)
    out2 = jax.block_until_ready(hit_class_forward(pci2, probs2, vals2))
    ref2 = _reference_forward(pci2, probs2, vals2)
    assert out2.shape == (37, 4, 4, 4)
    assert bool(jnp.all(jnp.isfinite(out2)))
    assert jnp.allclose(out2, ref2, atol=1e-5, rtol=1e-5)

    print("KERNEL_OK")
</pallas_src>

<mosaic_0001>
module attributes {stable_mosaic.version = 11 : i64} {
  func.func @_hit_class_kernel(%arg0: i32, %arg1: memref<3x2xi32, #tpu.memory_space<vmem>>, %arg2: memref<3x128xf32, #tpu.memory_space<vmem>>, %arg3: memref<128x128xf32, #tpu.memory_space<vmem>>, %arg4: memref<128x128xf32, #tpu.memory_space<vmem>>, %arg5: memref<3x128xf32, #tpu.memory_space<vmem>>) attributes {dimension_semantics = [#tpu.dimension_semantics<parallel>], iteration_bounds = array<i64: 1>, scalar_prefetch = 0 : i64, scratch_operands = 0 : i64, tpu.core_type = #tpu.core_type<tc>, window_params = [{transform_indices = @transform_0, window_bounds = array<i64: 3, 2>}, {transform_indices = @transform_1, window_bounds = array<i64: 3, 128>}, {pipeline_mode = #tpu.pipeline_mode<synchronous>, transform_indices = @transform_2, window_bounds = array<i64: 128, 128>}, {pipeline_mode = #tpu.pipeline_mode<synchronous>, transform_indices = @transform_3, window_bounds = array<i64: 128, 128>}, {transform_indices = @transform_4, window_bounds = array<i64: 3, 128>}]} {
    %0 = tpu.iota {dimensions = array<i32: 1>} : vector<3x128xi32>
    %c0 = arith.constant 0 : index
    %c0_0 = arith.constant 0 : index
    %1 = vector.load %arg1[%c0, %c0_0] : memref<3x2xi32, #tpu.memory_space<vmem>>, vector<3x1xi32>
    %c0_1 = arith.constant 0 : index
    %c1 = arith.constant 1 : index
    %2 = vector.load %arg1[%c0_1, %c1] : memref<3x2xi32, #tpu.memory_space<vmem>>, vector<3x1xi32>
    %3 = vector.broadcast %1 : vector<3x1xi32> to vector<3x128xi32>
    %4 = arith.cmpi eq, %0, %3 : vector<3x128xi32>
    %c64_i32 = arith.constant 64 : i32
    %5 = vector.broadcast %c64_i32 : i32 to vector<3x1xi32>
    %6 = arith.addi %2, %5 : vector<3x1xi32>
    %7 = vector.broadcast %6 : vector<3x1xi32> to vector<3x128xi32>
    %8 = arith.cmpi eq, %0, %7 : vector<3x128xi32>
    %9 = arith.ori %4, %8 : vector<3x128xi1>
    %10 = arith.extui %9 : vector<3x128xi1> to vector<3x128xi32>
    %11 = arith.sitofp %10 : vector<3x128xi32> to vector<3x128xf32>
    %c0_2 = arith.constant 0 : index
    %c0_3 = arith.constant 0 : index
    %12 = vector.load %arg3[%c0_2, %c0_3] : memref<128x128xf32, #tpu.memory_space<vmem>>, vector<128x128xf32>
    %cst = arith.constant dense<0.000000e+00> : vector<3x128xf32>
    %13 = tpu.matmul %11, %12, %cst {dimension_numbers = #tpu.dot_dimension_numbers<[1], [0], [0], [1], [0, 0, 1, 1], [], []>} : vector<3x128xf32>, vector<128x128xf32>, vector<3x128xf32> -> vector<3x128xf32>
    %c0_4 = arith.constant 0 : index
    %c0_5 = arith.constant 0 : index
    %14 = vector.load %arg2[%c0_4, %c0_5] : memref<3x128xf32, #tpu.memory_space<vmem>>, vector<3x128xf32>
    %15 = arith.mulf %14, %13 : vector<3x128xf32>
    %cst_6 = arith.constant 0.999998986 : f32
    %16 = vector.broadcast %cst_6 : f32 to vector<3x128xf32>
    %17 = arith.minimumf %15, %16 : vector<3x128xf32>
    %cst_7 = arith.constant 0.000000e+00 : f32
    %18 = vector.broadcast %cst_7 : f32 to vector<3x128xf32>
    %19 = arith.select %9, %18, %17 : vector<3x128xi1>, vector<3x128xf32>
    %c0_8 = arith.constant 0 : index
    %c0_9 = arith.constant 0 : index
    %20 = vector.load %arg4[%c0_8, %c0_9] : memref<128x128xf32, #tpu.memory_space<vmem>>, vector<128x128xf32>
    %cst_10 = arith.constant dense<0.000000e+00> : vector<3x128xf32>
    %21 = tpu.matmul %19, %20, %cst_10 {dimension_numbers = #tpu.dot_dimension_numbers<[1], [0], [0], [1], [0, 0, 1, 1], [], []>} : vector<3x128xf32>, vector<128x128xf32>, vector<3x128xf32> -> vector<3x128xf32>
    %cst_11 = arith.constant 1.000000e+00 : f32
    %22 = vector.broadcast %cst_11 : f32 to vector<3x128xf32>
    %23 = arith.subf %22, %21 : vector<3x128xf32>
    %24 = arith.select %9, %23, %17 : vector<3x128xi1>, vector<3x128xf32>
    %cst_12 = arith.constant 9.99999997E-7 : f32
    %cst_13 = arith.constant 0.999998986 : f32
    %25 = vector.broadcast %cst_12 : f32 to vector<3x128xf32>
    %26 = arith.maximumf %25, %24 : vector<3x128xf32>
    %27 = vector.broadcast %cst_13 : f32 to vector<3x128xf32>
    %28 = arith.minimumf %27, %26 : vector<3x128xf32>
    %c0_14 = arith.constant 0 : index
    %c0_15 = arith.constant 0 : index
    %29 = vector.load %arg5[%c0_14, %c0_15] : memref<3x128xf32, #tpu.memory_space<vmem>>, vector<3x128xf32>
    tpu.vector_store %arg5[%c0_14, %c0_15], %28 {strides = array<i32>} : memref<3x128xf32, #tpu.memory_space<vmem>>, vector<3x128xf32>,
    return
  }
  func.func @transform_0(%arg0: i32) -> (i32, i32) {
    %c0_i32 = arith.constant 0 : i32
    %c0_i32_0 = arith.constant 0 : i32
    return %arg0, %c0_i32 : i32, i32
  }
  func.func @transform_1(%arg0: i32) -> (i32, i32) {
    %c0_i32 = arith.constant 0 : i32
    %c0_i32_0 = arith.constant 0 : i32
    return %arg0, %c0_i32 : i32, i32
  }
  func.func @transform_2(%arg0: i32) -> (i32, i32) {
    %c0_i32 = arith.constant 0 : i32
    %c0_i32_0 = arith.constant 0 : i32
    %c0_i32_1 = arith.constant 0 : i32
    return %c0_i32, %c0_i32_0 : i32, i32
  }
  func.func @transform_3(%arg0: i32) -> (i32, i32) {
    %c0_i32 = arith.constant 0 : i32
    %c0_i32_0 = arith.constant 0 : i32
    %c0_i32_1 = arith.constant 0 : i32
    return %c0_i32, %c0_i32_0 : i32, i32
  }
  func.func @transform_4(%arg0: i32) -> (i32, i32) {
    %c0_i32 = arith.constant 0 : i32
    %c0_i32_0 = arith.constant 0 : i32
    return %arg0, %c0_i32 : i32, i32
  }
}

</mosaic_0001>

<llo_original>
// kernel: tpu_custom_call.1
$region0: #{tpu_custom_call.1}
  #allocation0 [shape = 'u32[]', space=smem, size = 0x4, offset = 0x4, fixed_abs, tag = 'smem constant byte address 0x4 - core index']
  #allocation1 [shape = 'u32[144,128]{1,0:T(1,128)}', space=vmem, size = 0x12000, scoped, tag = 'internal scratch']
  %s0 = inlined_call_operand.vmem [shape: s32[3,2], index: 0, kind: input, shape index: {}]
  %s1 = inlined_call_operand.vmem [shape: f32[3,128], index: 1, kind: input, shape index: {}]
  %s2 = inlined_call_operand.hbm [shape: f32[128,128], index: 2, kind: input, shape index: {}]
  %s3 = inlined_call_operand.hbm [shape: f32[128,128], index: 3, kind: input, shape index: {}]
  %s4 = inlined_call_operand.hbm [shape: f32[3,128], index: 4, kind: output, shape index: {}]
  %s5 = sld [smem:[#allocation0]]
  $region34: #{tpu_custom_call.1} parent=0
    _
  %s7 = ssub.s32 1, %s5
  %s8 = scalar_select 0, %s7, %s5
  $region1: #{tpu_custom_call.1} parent=0
    #allocation2 [shape = 'u8[65536]{0}', space=vmem, size = 0x10000, scoped, tag = 'input window, operand 2, single buffered']
    #allocation3 [shape = 's32[1]{0}', space=sflag, size = 0x4, scoped, tag = 'scoped memory for tpu_custom_call.1']
    #allocation4 [shape = 's32[1]{0}', space=sflag, size = 0x4, scoped, tag = 'scoped memory for tpu_custom_call.1']
    #allocation5 [shape = 'u8[65536]{0}', space=vmem, size = 0x10000, scoped, tag = 'input window, operand 3, single buffered']
    #allocation6 [shape = 's32[1]{0}', space=sflag, size = 0x4, scoped, tag = 'scoped memory for tpu_custom_call.1']
    #allocation7 [shape = 'u8[2048]{0}', space=vmem, size = 0x800, scoped, tag = 'output window, operand 0, single buffered']
    %9 = vsyncpa [#allocation3], 0
    %10 = vsyncpa [#allocation6], 0
    %11 = vsyncpa [#allocation4], 0
    // Predicated region
    $region2: #{tpu_custom_call.1} parent=1 // pred_check
      _
    $region3: #{tpu_custom_call.1} parent=1 // pred_check_branch
      %13 = sbr.rel (0) target = $region5
    $region4: #{tpu_custom_call.1} parent=1 // pred_region
      _
    $region5: #{tpu_custom_call.1} parent=1 // pred_fallthru
      _
    // Predicated region
    $region6: #{tpu_custom_call.1} parent=1 // pred_check
      _
    $region7: #{tpu_custom_call.1} parent=1 // pred_check_branch
      %15 = sbr.rel (0) target = $region9
    $region8: #{tpu_custom_call.1} parent=1 // pred_region
      _
    $region9: #{tpu_custom_call.1} parent=1 // pred_fallthru
      _
    // Predicated region
    $region10: #{tpu_custom_call.1} parent=1 // pred_check
      _
    $region11: #{tpu_custom_call.1} parent=1 // pred_check_branch
      %17 = sbr.rel (0) target = $region13
    $region12: #{tpu_custom_call.1} parent=1 // pred_region
      %s19 = ssub.s32 2048, 2048
      %20 = vsyncadd [#allocation3], %s19
      %s21 = sshll.u32 [#allocation2], 4
      %s22 = int_to_ptr.vmem [resolvable:$true] %s21
      %27 = dma.hbm_to_vmem [thread:$0]  %s2, 2048, %s22, [#allocation3], 128, 128, 8
    $region13: #{tpu_custom_call.1} parent=1 // pred_fallthru
      _
    // Predicated region
    $region14: #{tpu_custom_call.1} parent=1 // pred_check
      _
    $region15: #{tpu_custom_call.1} parent=1 // pred_check_branch
      %29 = sbr.rel (0) target = $region17
    $region16: #{tpu_custom_call.1} parent=1 // pred_region
      %s31 = ssub.s32 2048, 2048
      %32 = vsyncadd [#allocation6], %s31
      %s33 = sshll.u32 [#allocation5], 4
      %s34 = int_to_ptr.vmem [resolvable:$true] %s33
      %39 = dma.hbm_to_vmem [thread:$0]  %s3, 2048, %s34, [#allocation6], 128, 128, 8
    $region17: #{tpu_custom_call.1} parent=1 // pred_fallthru
      _
    // Predicated region
    $region18: #{tpu_custom_call.1} parent=1 // pred_check
      _
    $region19: #{tpu_custom_call.1} parent=1 // pred_check_branch
      %41 = sbr.rel (0) target = $region21
    $region20: #{tpu_custom_call.1} parent=1 // pred_region
      %42 = dma.done [#allocation3], 2048
    $region21: #{tpu_custom_call.1} parent=1 // pred_fallthru
      _
    // Predicated region
    $region22: #{tpu_custom_call.1} parent=1 // pred_check
      _
    $region23: #{tpu_custom_call.1} parent=1 // pred_check_branch
      %44 = sbr.rel (0) target = $region25
    $region24: #{tpu_custom_call.1} parent=1 // pred_region
      %45 = dma.done [#allocation6], 2048
    $region25: #{tpu_custom_call.1} parent=1 // pred_fallthru
      _
    %v46 = vlaneseq
    %v47 = vand.u32 %v46, 127
    %v48 = vld [vmem:[%s0] sm:$0x7]
    %49 = vset.pattern.permute.xlu0 0
    %50 = vperm.xlu0 %49, %v48
    %v51 = vpop.permute.xlu0 %50
    %vm52 = vcmp.eq.s32.totalorder %v47, %v51
    %v53 = vadd.s32 %v48, 64
    %54 = vset.pattern.permute.xlu0 1
    %55 = vperm.xlu0 %54, %v53
    %v56 = vpop.permute.xlu0 %55
    %vm57 = vcmp.eq.s32.totalorder %v47, %v56
    %vm58 = vmor %vm52, %vm57
    %v59 = vsel %vm58, 1, 0
    %v60 = vcvt.s32.f32 %v59
    %v61 = vld [vmem:[#allocation2] sm:$0xff]
    %v62 = vld [vmem:[#allocation2 + $0x8] sm:$0xff]
    %v63 = vld [vmem:[#allocation2 + $0x10] sm:$0xff]
    %v64 = vld [vmem:[#allocation2 + $0x18] sm:$0xff]
    %v65 = vld [vmem:[#allocation2 + $0x20] sm:$0xff]
    %v66 = vld [vmem:[#allocation2 + $0x28] sm:$0xff]
    %v67 = vld [vmem:[#allocation2 + $0x30] sm:$0xff]
    %v68 = vld [vmem:[#allocation2 + $0x38] sm:$0xff]
    %v69 = vld [vmem:[#allocation2 + $0x40] sm:$0xff]
    %v70 = vld [vmem:[#allocation2 + $0x48] sm:$0xff]
    %v71 = vld [vmem:[#allocation2 + $0x50] sm:$0xff]
    %v72 = vld [vmem:[#allocation2 + $0x58] sm:$0xff]
    %v73 = vld [vmem:[#allocation2 + $0x60] sm:$0xff]
    %v74 = vld [vmem:[#allocation2 + $0x68] sm:$0xff]
    %v75 = vld [vmem:[#allocation2 + $0x70] sm:$0xff]
    %v76 = vld [vmem:[#allocation2 + $0x78] sm:$0xff]
    %77 = vmatprep.subr.mxu0 0.0
    %78 = vmatpush1.msra.mxu0 %v61
    %79 = vmatprep.subr.mxu0 0.0
    %80 = vmatpush1.msra.mxu0 %v62
    %81 = vmatprep.subr.mxu0 0.0
    %82 = vmatpush1.msra.mxu0 %v63
    %83 = vmatprep.subr.mxu0 0.0
    %84 = vmatpush1.msra.mxu0 %v64
    %85 = vmatprep.subr.mxu0 0.0
    %86 = vmatpush1.msra.mxu0 %v65
    %87 = vmatprep.subr.mxu0 0.0
    %88 = vmatpush1.msra.mxu0 %v66
    %89 = vmatprep.subr.mxu0 0.0
    %90 = vmatpush1.msra.mxu0 %v67
    %91 = vmatprep.subr.mxu0 0.0
    %92 = vmatpush1.msra.mxu0 %v68
    %93 = vmatprep.subr.mxu0 0.0
    %94 = vmatpush1.msra.mxu0 %v69
    %95 = vmatprep.subr.mxu0 0.0
    %96 = vmatpush1.msra.mxu0 %v70
    %97 = vmatprep.subr.mxu0 0.0
    %98 = vmatpush1.msra.mxu0 %v71
    %99 = vmatprep.subr.mxu0 0.0
    %100 = vmatpush1.msra.mxu0 %v72
    %101 = vmatprep.subr.mxu0 0.0
    %102 = vmatpush1.msra.mxu0 %v73
    %103 = vmatprep.subr.mxu0 0.0
    %104 = vmatpush1.msra.mxu0 %v74
    %105 = vmatprep.subr.mxu0 0.0
    %106 = vmatpush1.msra.mxu0 %v75
    %107 = vmatprep.subr.mxu0 0.0
    %108 = vmatpush1.msra.mxu0 %v76
    %109 = vmatprep.subr.mxu0 0.0
    %110 = vmatpush1.msra.mxu0 0.0
    %111 = vmatprep.subr.mxu0 0.0
    %112 = vmatpush1.msra.mxu0 0.0
    %113 = vmatprep.subr.mxu0 0.0
    %114 = vmatpush1.msra.mxu0 0.0
    %115 = vmatprep.subr.mxu0 0.0
    %116 = vmatpush1.msra.mxu0 0.0
    %117 = vmatprep.subr.mxu0 0.0
    %118 = vmatpush1.msra.mxu0 0.0
    %119 = vmatprep.subr.mxu0 0.0
    %120 = vmatpush1.msra.mxu0 0.0
    %121 = vmatprep.subr.mxu0 0.0
    %122 = vmatpush1.msra.mxu0 0.0
    %123 = vmatprep.subr.mxu0 0.0
    %124 = vmatpush1.msra.mxu0 0.0
    %125 = vmatprep.subr.mxu0 0.0
    %126 = vmatpush1.msra.mxu0 0.0
    %127 = vmatprep.subr.mxu0 0.0
    %128 = vmatpush1.msra.mxu0 0.0
    %129 = vmatprep.subr.mxu0 0.0
    %130 = vmatpush1.msra.mxu0 0.0
    %131 = vmatprep.subr.mxu0 0.0
    %132 = vmatpush1.msra.mxu0 0.0
    %133 = vmatprep.subr.mxu0 0.0
    %134 = vmatpush1.msra.mxu0 0.0
    %135 = vmatprep.subr.mxu0 0.0
    %136 = vmatpush1.msra.mxu0 0.0
    %137 = vmatprep.subr.mxu0 0.0
    %138 = vmatpush1.msra.mxu0 0.0
    %139 = vmatprep.subr.mxu0 0.0
    %140 = vmatpush1.msra.mxu0 0.0
    %141 = vmatprep.mubr.f32.mxu0 0.0
    %142 = vmatmul.mubr.f32.gmra.mrb[0].mxu0 %v60
    %v143 = vpop.f32.mrb[0].mxu0
    %v144 = vadd.f32 0.0, %v143
    %v145 = vpop.f32.mrb[0].mxu0
    %146 = vdwg.mxu0
    %v147 = vld [vmem:[%s1] sm:$0x7]
    %v148 = vmul.f32 %v147, %v144
    %v149 = vmin.f32 %v148, 0.999999
    %v150 = vsel %vm58, 0.0, %v149
    %v151 = vld [vmem:[#allocation5] sm:$0xff]
    %v152 = vld [vmem:[#allocation5 + $0x8] sm:$0xff]
    %v153 = vld [vmem:[#allocation5 + $0x10] sm:$0xff]
    %v154 = vld [vmem:[#allocation5 + $0x18] sm:$0xff]
    %v155 = vld [vmem:[#allocation5 + $0x20] sm:$0xff]
    %v156 = vld [vmem:[#allocation5 + $0x28] sm:$0xff]
    %v157 = vld [vmem:[#allocation5 + $0x30] sm:$0xff]
    %v158 = vld [vmem:[#allocation5 + $0x38] sm:$0xff]
    %v159 = vld [vmem:[#allocation5 + $0x40] sm:$0xff]
    %v160 = vld [vmem:[#allocation5 + $0x48] sm:$0xff]
    %v161 = vld [vmem:[#allocation5 + $0x50] sm:$0xff]
    %v162 = vld [vmem:[#allocation5 + $0x58] sm:$0xff]
    %v163 = vld [vmem:[#allocation5 + $0x60] sm:$0xff]
    %v164 = vld [vmem:[#allocation5 + $0x68] sm:$0xff]
    %v165 = vld [vmem:[#allocation5 + $0x70] sm:$0xff]
    %v166 = vld [vmem:[#allocation5 + $0x78] sm:$0xff]
    %167 = vmatprep.subr.mxu0 0.0
    %168 = vmatpush1.msra.mxu0 %v151
    %169 = vmatprep.subr.mxu0 0.0
    %170 = vmatpush1.msra.mxu0 %v152
    %171 = vmatprep.subr.mxu0 0.0
    %172 = vmatpush1.msra.mxu0 %v153
    %173 = vmatprep.subr.mxu0 0.0
    %174 = vmatpush1.msra.mxu0 %v154
    %175 = vmatprep.subr.mxu0 0.0
    %176 = vmatpush1.msra.mxu0 %v155
    %177 = vmatprep.subr.mxu0 0.0
    %178 = vmatpush1.msra.mxu0 %v156
    %179 = vmatprep.subr.mxu0 0.0
    %180 = vmatpush1.msra.mxu0 %v157
    %181 = vmatprep.subr.mxu0 0.0
    %182 = vmatpush1.msra.mxu0 %v158
    %183 = vmatprep.subr.mxu0 0.0
    %184 = vmatpush1.msra.mxu0 %v159
    %185 = vmatprep.subr.mxu0 0.0
    %186 = vmatpush1.msra.mxu0 %v160
    %187 = vmatprep.subr.mxu0 0.0
    %188 = vmatpush1.msra.mxu0 %v161
    %189 = vmatprep.subr.mxu0 0.0
    %190 = vmatpush1.msra.mxu0 %v162
    %191 = vmatprep.subr.mxu0 0.0
    %192 = vmatpush1.msra.mxu0 %v163
    %193 = vmatprep.subr.mxu0 0.0
    %194 = vmatpush1.msra.mxu0 %v164
    %195 = vmatprep.subr.mxu0 0.0
    %196 = vmatpush1.msra.mxu0 %v165
    %197 = vmatprep.subr.mxu0 0.0
    %198 = vmatpush1.msra.mxu0 %v166
    %199 = vmatprep.subr.mxu0 0.0
    %200 = vmatpush1.msra.mxu0 0.0
    %201 = vmatprep.subr.mxu0 0.0
    %202 = vmatpush1.msra.mxu0 0.0
    %203 = vmatprep.subr.mxu0 0.0
    %204 = vmatpush1.msra.mxu0 0.0
    %205 = vmatprep.subr.mxu0 0.0
    %206 = vmatpush1.msra.mxu0 0.0
    %207 = vmatprep.subr.mxu0 0.0
    %208 = vmatpush1.msra.mxu0 0.0
    %209 = vmatprep.subr.mxu0 0.0
    %210 = vmatpush1.msra.mxu0 0.0
    %211 = vmatprep.subr.mxu0 0.0
    %212 = vmatpush1.msra.mxu0 0.0
    %213 = vmatprep.subr.mxu0 0.0
    %214 = vmatpush1.msra.mxu0 0.0
    %215 = vmatprep.subr.mxu0 0.0
    %216 = vmatpush1.msra.mxu0 0.0
    %217 = vmatprep.subr.mxu0 0.0
    %218 = vmatpush1.msra.mxu0 0.0
    %219 = vmatprep.subr.mxu0 0.0
    %220 = vmatpush1.msra.mxu0 0.0
    %221 = vmatprep.subr.mxu0 0.0
    %222 = vmatpush1.msra.mxu0 0.0
    %223 = vmatprep.subr.mxu0 0.0
    %224 = vmatpush1.msra.mxu0 0.0
    %225 = vmatprep.subr.mxu0 0.0
    %226 = vmatpush1.msra.mxu0 0.0
    %227 = vmatprep.subr.mxu0 0.0
    %228 = vmatpush1.msra.mxu0 0.0
    %229 = vmatprep.subr.mxu0 0.0
    %230 = vmatpush1.msra.mxu0 0.0
    %231 = vmatprep.mubr.f32.mxu0 0.0
    %232 = vmatmul.mubr.f32.gmra.mrb[0].mxu0 %v150
    %v233 = vpop.f32.mrb[0].mxu0
    %v234 = vadd.f32 0.0, %v233
    %v235 = vpop.f32.mrb[0].mxu0
    %236 = vdwg.mxu0
    %v237 = vsub.f32 1.0, %v234
    %v238 = vsel %vm58, %v237, %v149
    %v239 = vmax.f32 %v238, 1e-06
    %v240 = vmin.f32 %v239, 0.999999
    %241 = vst [vmem:[#allocation7] sm:$0x7] %v240
    // Predicated region
    $region26: #{tpu_custom_call.1} parent=1 // pred_check
      _
    $region27: #{tpu_custom_call.1} parent=1 // pred_check_branch
      %243 = sbr.rel (0) target = $region29
    $region28: #{tpu_custom_call.1} parent=1 // pred_region
      %s245 = ssub.s32 64, 64
      %246 = vsyncadd [#allocation4], %s245
      %s248 = sshll.u32 [#allocation7], 4
      %s249 = int_to_ptr.vmem [resolvable:$true] %s248
      %251 = dma.vmem_to_hbm [thread:$0]  %s249, 64, %s4, [#allocation4]
    $region29: #{tpu_custom_call.1} parent=1 // pred_fallthru
      _
    // Predicated region
    $region30: #{tpu_custom_call.1} parent=1 // pred_check
      _
    $region31: #{tpu_custom_call.1} parent=1 // pred_check_branch
      %253 = sbr.rel (0) target = $region33
    $region32: #{tpu_custom_call.1} parent=1 // pred_region
      %254 = dma.done [#allocation4], 64
    $region33: #{tpu_custom_call.1} parent=1 // pred_fallthru
      _
    %255 = vsyncpa [#allocation3], 1
    %256 = vsyncpa [#allocation6], 1
    %257 = vsyncpa [#allocation4], 1

</llo_original>
